<compile_context>
chip_gen: v7x
topology: tpu7x:2x2x1
jax: 0.10.0
libtpu: 0.0.40
codegen_flags: <defaults>
</compile_context>

<pallas_src>
import jax
import jax.numpy as jnp
from jax.experimental import pallas as pl
from jax.experimental.pallas import tpu as pltpu


def _conv_gemm_kernel(w_ref, p_ref, o_ref, acc_ref):
    # w: (O, tk) bf16   p: (tk, tn) bf16   o: (O, tn)   acc: (O, tn) f32
    @pl.when(pl.program_id(2) == 0)
    def _():
        acc_ref[...] = jnp.zeros_like(acc_ref)

    acc_ref[...] += jnp.dot(w_ref[...], p_ref[...],
                            preferred_element_type=jnp.float32)

    @pl.when(pl.program_id(2) == pl.num_programs(2) - 1)
    def _():
        o_ref[...] = acc_ref[...].astype(o_ref.dtype)


def _conv_gemm_bias_kernel(w_ref, b_ref, p_ref, o_ref, acc_ref):
    # w: (O, tk)   b: (O, 1) f32   p: (tk, tn)   o: (O, tn)   acc: (O, tn) f32
    @pl.when(pl.program_id(2) == 0)
    def _():
        acc_ref[...] = jnp.zeros_like(acc_ref)

    acc_ref[...] += jnp.dot(w_ref[...], p_ref[...],
                            preferred_element_type=jnp.float32)

    @pl.when(pl.program_id(2) == pl.num_programs(2) - 1)
    def _():
        o_ref[...] = (acc_ref[...] + b_ref[...]).astype(o_ref.dtype)


def _round_up(x, m):
    return ((x + m - 1) // m) * m


def _choose_spatial_tile(ohw, n_batch, bytes_per_col,
                         max_tile=16384, vmem_budget=20 * 1024 * 1024):
    """Pick the lane (flattened-spatial) tile.

    * Large enough to amortize the ~0.35 us per-grid-step overhead.
    * Small enough that the double-buffered in/out blocks + f32 accumulator
      stay well inside the 32 MiB scoped VMEM on every generation.
    * Either the full spatial extent (one contiguous DMA per image, fully
      unmasked lane-dense stores) or balanced multiple-of-128 tiles with an
      even step count, so v7x's two TensorCores get near-equal work.
    """
    fit = max(128, min(max_tile, (vmem_budget // bytes_per_col) // 128 * 128))
    if ohw <= fit and (n_batch >= 2 or ohw <= 256):
        return ohw                            # one full-extent, lane-dense tile
    nt = max(1, -(-ohw // fit))               # tiles needed to fit VMEM
    if n_batch == 1:
        nt = max(2, nt + (nt & 1))            # even #steps -> balanced 2-TC split
    tn = _round_up(-(-ohw // nt), 128)        # balanced, multiple of 128
    return ohw if tn >= ohw else tn


def aten_convolution(x, weight, bias=None, stride=(1, 1), padding=(0, 0),
                     dilation=(1, 1), transposed=False, output_padding=(0, 0),
                     groups=1, *, use_bf16_gemm=True):
    """Semantics of torch.ops.aten.convolution.default for the 2-D,
    groups=1, non-transposed case (what this EfficientNet op uses)."""
    assert not transposed, "transposed conv not implemented"
    assert groups == 1, "grouped conv not implemented"

    N, C, H, W = x.shape
    O, Cw, KH, KW = weight.shape
    assert Cw == C
    SH, SW = stride
    PH, PW = padding
    DH, DW = dilation

    OH = (H + 2 * PH - DH * (KH - 1) - 1) // SH + 1
    OW = (W + 2 * PW - DW * (KW - 1) - 1) // SW + 1
    OHW = OH * OW
    K = KH * KW * C

    gemm_dtype = jnp.bfloat16 if use_bf16_gemm else x.dtype
    out_dtype = x.dtype

    # --- XLA glue (no FLOPs): pad, cast to bf16, im2col into (N, K, OH*OW),
    #     K ordered as (kh, kw, c).  One strided spatial slice per tap. ---
    xp = jnp.pad(x, ((0, 0), (0, 0), (PH, PH), (PW, PW))).astype(gemm_dtype)
    cols = []
    for kh in range(KH):
        for kw in range(KW):
            h0, w0 = kh * DH, kw * DW
            cols.append(xp[:, :, h0:h0 + SH * OH:SH, w0:w0 + SW * OW:SW])
    patches = jnp.stack(cols, axis=1).reshape(N, K, OHW)

    # weight OIHW -> (O, KH, KW, C) -> (O, K), matching the (kh, kw, c) order.
    w_mat = jnp.transpose(weight, (0, 2, 3, 1)).reshape(O, K).astype(gemm_dtype)

    # --- K-reduction split for large-K (e.g. 1x1) layers: near-equal
    #     multiple-of-8 chunks, minimal zero padding (zeros contribute 0). ---
    K_SPLIT = 512
    if K > K_SPLIT:
        kt_n = -(-K // K_SPLIT)
        tk = _round_up(-(-K // kt_n), 8)
        k_pad = tk * kt_n
        if k_pad > K:
            patches = jnp.pad(patches, ((0, 0), (0, k_pad - K), (0, 0)))
            w_mat = jnp.pad(w_mat, ((0, 0), (0, k_pad - K)))
    else:
        kt_n, tk = 1, K

    gemm_itemsize = jnp.dtype(gemm_dtype).itemsize
    out_itemsize = jnp.dtype(out_dtype).itemsize
    # double-buffered input + output columns, plus the f32 accumulator column
    bytes_per_col = 2 * (tk * gemm_itemsize + O * out_itemsize) + 4 * O
    tn = _choose_spatial_tile(OHW, N, bytes_per_col)
    grid = (N, pl.cdiv(OHW, tn), kt_n)

    w_spec = pl.BlockSpec((O, tk), lambda n, j, k: (0, k))
    patch_spec = pl.BlockSpec((None, tk, tn), lambda n, j, k: (n, k, j))
    out_spec = pl.BlockSpec((None, O, tn), lambda n, j, k: (n, 0, j))

    if bias is None:
        kernel = _conv_gemm_kernel
        in_specs = [w_spec, patch_spec]
        args = (w_mat, patches)
    else:
        kernel = _conv_gemm_bias_kernel
        b_col = jnp.asarray(bias, dtype=jnp.float32).reshape(O, 1)
        in_specs = [w_spec, pl.BlockSpec((O, 1), lambda n, j, k: (0, 0)),
                    patch_spec]
        args = (w_mat, b_col, patches)

    out = pl.pallas_call(
        kernel,
        out_shape=jax.ShapeDtypeStruct((N, O, OHW), out_dtype),
        grid_spec=pltpu.PrefetchScalarGridSpec(
            num_scalar_prefetch=0,
            grid=grid,
            in_specs=in_specs,
            out_specs=out_spec,
            scratch_shapes=[pltpu.VMEM((O, tn), jnp.float32)],
        ),
        compiler_params=pltpu.CompilerParams(
            dimension_semantics=("parallel", "parallel", "arbitrary"),
            vmem_limit_bytes=32 * 1024 * 1024),
    )(*args)

    # (N, O, OH*OW) -> (N, O, OH, OW): zero-cost reshape, already NCHW.
    return out.reshape(N, O, OH, OW)


if __name__ == "__main__":
    key = jax.random.PRNGKey(0)
    kx, kw, kb, kx2, kw2 = jax.random.split(key, 5)

    # ---- Case 1: EfficientNet-lite style stem conv (3x3, stride 2, pad 1).
    N, C, H, W = 2, 3, 16, 16
    O, KH, KW = 8, 3, 3
    stride, padding, dilation = (2, 2), (1, 1), (1, 1)

    x = jax.random.normal(kx, (N, C, H, W), dtype=jnp.float32)
    w = jax.random.normal(kw, (O, C, KH, KW), dtype=jnp.float32) * 0.1

    y = aten_convolution(x, w, None, stride, padding, dilation,
                         False, (0, 0), 1)
    y = jax.block_until_ready(y)

    # Reference with the same bf16-quantized operands (kernel uses bf16 GEMM
    # operands with f32 accumulation).
    xq = x.astype(jnp.bfloat16).astype(jnp.float32)
    wq = w.astype(jnp.bfloat16).astype(jnp.float32)
    y_ref = jax.lax.conv_general_dilated(
        xq, wq, window_strides=stride,
        padding=[(padding[0], padding[0]), (padding[1], padding[1])],
        rhs_dilation=dilation,
        dimension_numbers=("NCHW", "OIHW", "NCHW"))
    assert y.shape == y_ref.shape, (y.shape, y_ref.shape)
    assert jnp.allclose(y, y_ref, rtol=2e-3, atol=2e-3), \
        float(jnp.max(jnp.abs(y - y_ref)))

    # Bias path.
    b = jax.random.normal(kb, (O,), dtype=jnp.float32)
    yb = aten_convolution(x, w, b, stride, padding, dilation,
                          False, (0, 0), 1)
    yb = jax.block_until_ready(yb)
    yb_ref = y_ref + b[None, :, None, None]
    assert jnp.allclose(yb, yb_ref, rtol=2e-3, atol=2e-3), \
        float(jnp.max(jnp.abs(yb - yb_ref)))

    # ---- Case 2: large-K 1x1 conv to exercise the K-reduction grid axis
    #      (K = 576 > 512 -> two K steps with the f32 accumulator) and the
    #      N == 1 balanced-tile path.
    N2, C2, H2, W2, O2 = 1, 576, 8, 8, 16
    x2 = jax.random.normal(kx2, (N2, C2, H2, W2), dtype=jnp.float32)
    w2 = jax.random.normal(kw2, (O2, C2, 1, 1), dtype=jnp.float32) * 0.1

    y2 = aten_convolution(x2, w2, None, (1, 1), (0, 0), (1, 1),
                          False, (0, 0), 1)
    y2 = jax.block_until_ready(y2)
    x2q = x2.astype(jnp.bfloat16).astype(jnp.float32)
    w2q = w2.astype(jnp.bfloat16).astype(jnp.float32)
    y2_ref = jax.lax.conv_general_dilated(
        x2q, w2q, window_strides=(1, 1), padding=[(0, 0), (0, 0)],
        rhs_dilation=(1, 1), dimension_numbers=("NCHW", "OIHW", "NCHW"))
    assert y2.shape == y2_ref.shape, (y2.shape, y2_ref.shape)
    assert jnp.allclose(y2, y2_ref, rtol=2e-3, atol=2e-3), \
        float(jnp.max(jnp.abs(y2 - y2_ref)))

    print("KERNEL_OK")
</pallas_src>

<mosaic_0001>
module attributes {stable_mosaic.version = 11 : i64} {
  func.func @_conv_gemm_kernel(%arg0: i32, %arg1: i32, %arg2: i32, %arg3: memref<8x27xbf16, #tpu.memory_space<vmem>>, %arg4: memref<1x27x64xbf16, #tpu.memory_space<vmem>>, %arg5: memref<1x8x64xf32, #tpu.memory_space<vmem>>, %arg6: memref<8x64xf32, #tpu.memory_space<vmem>>) attributes {dimension_semantics = [#tpu.dimension_semantics<parallel>, #tpu.dimension_semantics<parallel>, #tpu.dimension_semantics<arbitrary>], iteration_bounds = array<i64: 2, 1, 1>, scalar_prefetch = 0 : i64, scratch_operands = 1 : i64, tpu.core_type = #tpu.core_type<tc>, window_params = [{transform_indices = @transform_0, window_bounds = array<i64: 8, 27>}, {transform_indices = @transform_1, window_bounds = array<i64: 1, 27, 64>}, {transform_indices = @transform_2, window_bounds = array<i64: 1, 8, 64>}]} {
    %c0_i32 = arith.constant 0 : i32
    %0 = arith.cmpi eq, %arg2, %c0_i32 : i32
    %1 = arith.extui %0 : i1 to i32
    %c0_i32_0 = arith.constant 0 : i32
    %2 = arith.cmpi ne, %1, %c0_i32_0 : i32
    scf.if %2 {
      %cst_11 = arith.constant 0.000000e+00 : f32
      %13 = vector.broadcast %cst_11 : f32 to vector<8x64xf32>
      %c0_12 = arith.constant 0 : index
      %c0_13 = arith.constant 0 : index
      %14 = vector.load %arg6[%c0_12, %c0_13] : memref<8x64xf32, #tpu.memory_space<vmem>>, vector<8x64xf32>
      tpu.vector_store %arg6[%c0_12, %c0_13], %13 {strides = array<i32>} : memref<8x64xf32, #tpu.memory_space<vmem>>, vector<8x64xf32>,
    } else {
    }
    %c0 = arith.constant 0 : index
    %c0_1 = arith.constant 0 : index
    %3 = vector.load %arg6[%c0, %c0_1] : memref<8x64xf32, #tpu.memory_space<vmem>>, vector<8x64xf32>
    %c0_2 = arith.constant 0 : index
    %c0_3 = arith.constant 0 : index
    %4 = vector.load %arg3[%c0_2, %c0_3] : memref<8x27xbf16, #tpu.memory_space<vmem>>, vector<8x27xbf16>
    %c0_4 = arith.constant 0 : index
    %c0_5 = arith.constant 0 : index
    %c0_6 = arith.constant 0 : index
    %5 = vector.load %arg4[%c0_4, %c0_5, %c0_6] : memref<1x27x64xbf16, #tpu.memory_space<vmem>>, vector<1x27x64xbf16>
    %6 = vector.shape_cast %5 : vector<1x27x64xbf16> to vector<27x64xbf16>
    %cst = arith.constant dense<0.000000e+00> : vector<8x64xf32>
    %7 = tpu.matmul %4, %6, %cst {dimension_numbers = #tpu.dot_dimension_numbers<[1], [0], [0], [1], [0, 0, 1, 1], [], []>} : vector<8x27xbf16>, vector<27x64xbf16>, vector<8x64xf32> -> vector<8x64xf32>
    %8 = arith.addf %3, %7 : vector<8x64xf32>
    %c0_7 = arith.constant 0 : index
    %c0_8 = arith.constant 0 : index
    %9 = vector.load %arg6[%c0_7, %c0_8] : memref<8x64xf32, #tpu.memory_space<vmem>>, vector<8x64xf32>
    tpu.vector_store %arg6[%c0_7, %c0_8], %8 {strides = array<i32>} : memref<8x64xf32, #tpu.memory_space<vmem>>, vector<8x64xf32>,
    %c0_i32_9 = arith.constant 0 : i32
    %10 = arith.cmpi eq, %arg2, %c0_i32_9 : i32
    %11 = arith.extui %10 : i1 to i32
    %c0_i32_10 = arith.constant 0 : i32
    %12 = arith.cmpi ne, %11, %c0_i32_10 : i32
    scf.if %12 {
      %c0_11 = arith.constant 0 : index
      %c0_12 = arith.constant 0 : index
      %13 = vector.load %arg6[%c0_11, %c0_12] : memref<8x64xf32, #tpu.memory_space<vmem>>, vector<8x64xf32>
      %c0_13 = arith.constant 0 : index
      %c0_14 = arith.constant 0 : index
      %c0_15 = arith.constant 0 : index
      %14 = vector.load %arg5[%c0_13, %c0_14, %c0_15] : memref<1x8x64xf32, #tpu.memory_space<vmem>>, vector<1x8x64xf32>
      %15 = vector.shape_cast %14 : vector<1x8x64xf32> to vector<8x64xf32>
      %16 = vector.shape_cast %13 : vector<8x64xf32> to vector<1x8x64xf32>
      tpu.vector_store %arg5[%c0_13, %c0_14, %c0_15], %16 {strides = array<i32>} : memref<1x8x64xf32, #tpu.memory_space<vmem>>, vector<1x8x64xf32>,
    } else {
    }
    return
  }
  func.func @transform_0(%arg0: i32, %arg1: i32, %arg2: i32) -> (i32, i32) {
    %c0_i32 = arith.constant 0 : i32
    %c0_i32_0 = arith.constant 0 : i32
    return %c0_i32, %arg2 : i32, i32
  }
  func.func @transform_1(%arg0: i32, %arg1: i32, %arg2: i32) -> (i32, i32, i32) {
    %c0_i32 = arith.constant 0 : i32
    return %arg0, %arg2, %arg1 : i32, i32, i32
  }
  func.func @transform_2(%arg0: i32, %arg1: i32, %arg2: i32) -> (i32, i32, i32) {
    %c0_i32 = arith.constant 0 : i32
    %c0_i32_0 = arith.constant 0 : i32
    return %arg0, %c0_i32, %arg1 : i32, i32, i32
  }
}

</mosaic_0001>

<llo_original>
// kernel: tpu_custom_call.1
$region0: #{tpu_custom_call.1}
  #allocation0 [shape = 'u32[]', space=smem, size = 0x4, offset = 0x4, fixed_abs, tag = 'smem constant byte address 0x4 - core index']
  #allocation1 [shape = 'u32[144,128]{1,0:T(1,128)}', space=vmem, size = 0x12000, scoped, tag = 'internal scratch']
  #allocation2 [shape = 'f32[8,64]{1,0:T(8,128)}', space=vmem, size = 0x1000, scoped, tag = 'scratch operand']
  %s0 = inlined_call_operand.vmem [shape: bf16[8,27], index: 0, kind: input, shape index: {}]
  %s1 = inlined_call_operand.vmem [shape: bf16[2,27,64], index: 1, kind: input, shape index: {}]
  %s2 = inlined_call_operand.hbm [shape: f32[2,8,64], index: 2, kind: output, shape index: {}]
  %s3 = sld [smem:[#allocation0]]
  $region49: #{tpu_custom_call.1} parent=0
    _
  %s5 = ssub.s32 1, %s3
  %s6 = scalar_select 0, %s5, %s3
  $region1: #{tpu_custom_call.1} parent=0
    #allocation3 [shape = 'u8[8192]{0}', space=vmem, size = 0x2000, scoped, tag = 'output window, operand 0']
    #allocation4 [shape = 's32[2]{0}', space=sflag, size = 0x8, scoped, tag = 'scoped memory for tpu_custom_call.1']
    %7 = vsyncpa [#allocation4], 0
    %s8 = scalar_lea.sflag [#allocation4], 1
    %9 = vsyncpa %s8, 0
    loop: start=0, step=1, limit=4
    $region2: #{tpu_custom_call.1} parent=1 // loop_pre_header
      _
    $region3: #{tpu_custom_call.1} parent=1 // loop_header
      %s11 = sphi 0, %s15
      %p12 = scmp.ge.s32.totalorder %s11, 4
      %s18 = sphi 0, %s37
      %s19 = sphi 0, %s33
      %s20 = sphi 0, %s29
      %s21 = sphi 0, %s18
      %s22 = sphi 0, %s19
      %s23 = sphi 0, %s20
      %s24 = sphi 0, %s21
      %s25 = sphi 0, %s22
      %s26 = sphi 0, %s23
      %s40 = sphi 0, %s42
      %s43 = sphi 0, %s40
      %s44 = sphi 0, %s43
      %s60 = sphi 0, %s44
      %s70 = sphi 0, %s72
      %s73 = sphi 0, %s70
      %s74 = sphi 0, %s73
      %s90 = sphi 0, %s74
      %s98 = sphi 0, %s100
      %s101 = sphi 0, %s98
      %s102 = sphi 0, %s101
      %s118 = sphi 0, %s102
    $region4: #{tpu_custom_call.1} parent=1 // loop_header_branch
      %14 = sbr.rel (%p12) target = $region8
    $region5: #{tpu_custom_call.1} parent=1 // loop_body
      %s16 = ssub.s32 %s11, 1
      %s17 = ssub.s32 %s11, 2
      %s27 = sadd.s32 1, %s20
      %p28 = scmp.ge.s32.totalorder %s27, 1
      %s29 = scalar_select %p28, 0, %s27
      %s30 = sadd.s32 1, %s19
      %s31 = scalar_select %p28, %s30, %s19
      %p32 = scmp.ge.s32.totalorder %s31, 1
      %s33 = scalar_select %p32, 0, %s31
      %s34 = sadd.s32 1, %s18
      %s35 = scalar_select %p32, %s34, %s18
      %p36 = scmp.ge.s32.totalorder %s35, 2
      %s37 = scalar_select %p36, 0, %s35
      %s38 = ssub.s32 %s20, %s29
      %p39 = scmp.eq.s32.totalorder %s38, 0
      %s41 = sadd.s32 %s40, 1
      %s42 = scalar_select %p39, %s40, %s41
      %p45 = pneg %p39
      %p46 = scmp.eq.s32.totalorder %s11, 1
      %p47 = por %p45, %p46
      %p48 = scmp.ne.s32.totalorder %s40, %s43
      %p49 = scmp.eq.s32.totalorder %s11, 0
      %p50 = por %p48, %p49
      %p51 = scmp.ne.s32.totalorder %s40, %s43
      %p52 = scmp.eq.s32.totalorder %s16, 1
      %p53 = por %p51, %p52
      %p54 = scmp.ne.s32.totalorder %s43, %s44
      %p55 = scmp.eq.s32.totalorder %s16, 0
      %p56 = por %p54, %p55
      %p57 = scmp.ne.s32.totalorder %s43, %s44
      %p58 = scmp.eq.s32.totalorder %s17, 1
      %p59 = por %p57, %p58
      %p61 = scmp.ne.s32.totalorder %s44, %s60
      %p62 = scmp.eq.s32.totalorder %s17, 0
      %p63 = por %p61, %p62
      %s64 = ssub.s32 %s18, %s37
      %s65 = ssub.s32 %s20, %s29
      %s66 = sor.u32 %s64, %s65
      %s67 = ssub.s32 %s19, %s33
      %s68 = sor.u32 %s66, %s67
      %p69 = scmp.eq.s32.totalorder %s68, 0
      %s71 = sadd.s32 %s70, 1
      %s72 = scalar_select %p69, %s70, %s71
      %p75 = pneg %p69
      %p76 = scmp.eq.s32.totalorder %s11, 1
      %p77 = por %p75, %p76
      %p78 = scmp.ne.s32.totalorder %s70, %s73
      %p79 = scmp.eq.s32.totalorder %s11, 0
      %p80 = por %p78, %p79
      %p81 = scmp.ne.s32.totalorder %s70, %s73
      %p82 = scmp.eq.s32.totalorder %s16, 1
      %p83 = por %p81, %p82
      %p84 = scmp.ne.s32.totalorder %s73, %s74
      %p85 = scmp.eq.s32.totalorder %s16, 0
      %p86 = por %p84, %p85
      %p87 = scmp.ne.s32.totalorder %s73, %s74
      %p88 = scmp.eq.s32.totalorder %s17, 1
      %p89 = por %p87, %p88
      %p91 = scmp.ne.s32.totalorder %s74, %s90
      %p92 = scmp.eq.s32.totalorder %s17, 0
      %p93 = por %p91, %p92
      %s94 = ssub.s32 %s18, %s37
      %s95 = ssub.s32 %s19, %s33
      %s96 = sor.u32 %s94, %s95
      %p97 = scmp.eq.s32.totalorder %s96, 0
      %s99 = sadd.s32 %s98, 1
      %s100 = scalar_select %p97, %s98, %s99
      %p103 = pneg %p97
      %p104 = scmp.eq.s32.totalorder %s11, 1
      %p105 = por %p103, %p104
      %p106 = scmp.ne.s32.totalorder %s98, %s101
      %p107 = scmp.eq.s32.totalorder %s11, 0
      %p108 = por %p106, %p107
      %p109 = scmp.ne.s32.totalorder %s98, %s101
      %p110 = scmp.eq.s32.totalorder %s16, 1
      %p111 = por %p109, %p110
      %p112 = scmp.ne.s32.totalorder %s101, %s102
      %p113 = scmp.eq.s32.totalorder %s16, 0
      %p114 = por %p112, %p113
      %p115 = scmp.ne.s32.totalorder %s101, %s102
      %p116 = scmp.eq.s32.totalorder %s17, 1
      %p117 = por %p115, %p116
      %p119 = scmp.ne.s32.totalorder %s102, %s118
      %p120 = scmp.eq.s32.totalorder %s17, 0
      %p121 = por %p119, %p120
      %p122 = scmp.le.s32.totalorder 1, %s11
      %p123 = scmp.lt.s32.totalorder %s11, 3
      %p124 = pnand %p122, %p123
      %p125 = pneg %p124
      // Predicated region
      $region9: #{tpu_custom_call.1} parent=5 // pred_check
        _
      $region10: #{tpu_custom_call.1} parent=5 // pred_check_branch
        %127 = sbr.rel (%p124) target = $region12
      $region11: #{tpu_custom_call.1} parent=5 // pred_region
        %s128 = ssub.s32 %s11, 1
        // Predicated region
        $region13: #{tpu_custom_call.1} parent=11 // pred_check
          %p129 = pneg %p56
        $region14: #{tpu_custom_call.1} parent=11 // pred_check_branch
          %131 = sbr.rel (%p129) target = $region16
        $region15: #{tpu_custom_call.1} parent=11 // pred_region
          %p132 = scmp.lt.s32.totalorder %s23, 0
          %s133 = scalar_select %p132, %s23, 0
          %s134 = smul.addr %s133, 4
          %s135 = scalar_lea.vmem %s0, %s134
        $region16: #{tpu_custom_call.1} parent=11 // pred_fallthru
          _
      $region12: #{tpu_custom_call.1} parent=5 // pred_fallthru
        _
      %p136 = scmp.lt.s32.totalorder %s11, 2
      // Predicated region
      $region17: #{tpu_custom_call.1} parent=5 // pred_check
        %p137 = pneg %p136
      $region18: #{tpu_custom_call.1} parent=5 // pred_check_branch
        %139 = sbr.rel (%p137) target = $region20
      $region19: #{tpu_custom_call.1} parent=5 // pred_region
        // Predicated region
        $region21: #{tpu_custom_call.1} parent=19 // pred_check
          %p140 = pneg %p80
        $region22: #{tpu_custom_call.1} parent=19 // pred_check_branch
          %142 = sbr.rel (%p140) target = $region24
        $region23: #{tpu_custom_call.1} parent=19 // pred_region
          %s143 = smul.u32 4, %s20
          %p144 = scmp.lt.s32.totalorder %s18, 1
          %s145 = scalar_select %p144, %s18, 1
          %p146 = scmp.lt.s32.totalorder %s143, 3
          %s147 = scalar_select %p146, %s143, 3
          %p148 = scmp.lt.s32.totalorder %s19, 0
          %s149 = scalar_select %p148, %s19, 0
          %s150 = sadd.s32 %s149, %s147
          %s151 = smul.addr %s145, 4
          %s152 = sadd.s32 %s150, %s151
          %s153 = smul.addr %s152, 4
          %s154 = scalar_lea.vmem %s1, %s153
          %s155 = smul.u32 4, %s20
        $region24: #{tpu_custom_call.1} parent=19 // pred_fallthru
          _
      $region20: #{tpu_custom_call.1} parent=5 // pred_fallthru
        _
      %p156 = scmp.le.s32.totalorder 1, %s11
      %p157 = scmp.lt.s32.totalorder %s11, 3
      %p158 = pnand %p156, %p157
      %p159 = pneg %p158
      // Predicated region
      $region25: #{tpu_custom_call.1} parent=5 // pred_check
        _
      $region26: #{tpu_custom_call.1} parent=5 // pred_check_branch
        %161 = sbr.rel (%p158) target = $region28
      $region27: #{tpu_custom_call.1} parent=5 // pred_region
        %s162 = ssub.s32 %s11, 1
        %p163 = scmp.lt.s32.totalorder %s23, 0
        %s164 = scalar_select %p163, %s23, 0
        %s165 = smul.addr %s164, 4
        %s166 = scalar_lea.vmem %s0, %s165
        %p167 = pneg %p56
        %p168 = pneg %p53
        %s169 = smul.u32 4, %s23
        %p170 = scmp.lt.s32.totalorder %s21, 1
        %s171 = scalar_select %p170, %s21, 1
        %p172 = scmp.lt.s32.totalorder %s169, 3
        %s173 = scalar_select %p172, %s169, 3
        %p174 = scmp.lt.s32.totalorder %s22, 0
        %s175 = scalar_select %p174, %s22, 0
        %s176 = sadd.s32 %s175, %s173
        %s177 = smul.addr %s171, 4
        %s178 = sadd.s32 %s176, %s177
        %s179 = smul.addr %s178, 4
        %s180 = scalar_lea.vmem %s1, %s179
        %p181 = pneg %p86
        %p182 = pneg %p83
        %p183 = pneg %p114
        %p184 = pneg %p111
        %s185 = sand.u32 %s101, 1
        %s186 = scalar_lea.sflag [#allocation4], %s185
        %s187 = sand.u32 %s101, 1
        %s188 = smul.addr %s187, 8
        %s189 = scalar_lea.vmem [#allocation3], %s188
        %p190 = scmp.lt.s32.totalorder %s23, 0
        %s191 = scalar_select %p190, %s23, 0
        %s192 = smul.addr %s191, 4
        %s193 = scalar_lea.vmem %s0, %s192
        %s194 = smul.u32 4, %s23
        %p195 = scmp.lt.s32.totalorder %s21, 1
        %s196 = scalar_select %p195, %s21, 1
        %p197 = scmp.lt.s32.totalorder %s194, 3
        %s198 = scalar_select %p197, %s194, 3
        %p199 = scmp.lt.s32.totalorder %s22, 0
        %s200 = scalar_select %p199, %s22, 0
        %s201 = sadd.s32 %s200, %s198
        %s202 = smul.addr %s196, 4
        %s203 = sadd.s32 %s201, %s202
        %s204 = smul.addr %s203, 4
        %s205 = scalar_lea.vmem %s1, %s204
        %s206 = smul.u32 4, %s23
        %p208 = scmp.eq.s32.totalorder %s23, 0
        // Predicated region
        $region29: #{tpu_custom_call.1} parent=27 // pred_check
          %p209 = pneg %p208
        $region30: #{tpu_custom_call.1} parent=27 // pred_check_branch
          %211 = sbr.rel (%p209) target = $region32
        $region31: #{tpu_custom_call.1} parent=27 // pred_region
          %vm212 = vcmask 523264
          %213 = vst.msk [vmem:[#allocation2] sm:$0xff] %vm212, 0.0
        $region32: #{tpu_custom_call.1} parent=27 // pred_fallthru
          _
        %v214 = vld [vmem:[#allocation2] sm:$0xff]
        %v215 = vld [vmem:[%s193] sm:$0xf]
        %v216 = vld [vmem:[%s205] sm:$0xf]
        %v217 = vld [vmem:[%s205 + $0x4] sm:$0xf]
        %v218 = vld [vmem:[%s205 + $0x8] sm:$0xf]
        %v219 = vld [vmem:[%s205 + $0xc] sm:$0x3]
        %v224 = vunpack.c.l.b16 %v216
        %v225 = vunpack.c.l.b16 %v217
        %v226 = vunpack.c.l.b16 %v218
        %v227 = vunpack.c.l.b16 %v219
        %v228 = vpack.c.b16 %v225, %v224
        %v229 = vpack.c.b16 %v227, %v226
        %vm231 = vcmask 220160
        %v233 = vsel %vm231, %v215, 0
        %vm235 = vcmask 1044480
        %vm236 = vcmask 1045504
        %v237 = vsel %vm235, 4294967295, 65535
        %v238 = vsel %vm236, %v237, 0
        %v240 = vand.u32 %v229, %v238
        %242 = vmatprep.subr.bf16.mxu0 0
        %243 = vmatpush1.bf16.msra.mxu0 %v228
        %244 = vmatprep.subr.bf16.mxu0 0
        %245 = vmatpush1.bf16.msra.mxu0 %v240
        %246 = vmatprep.subr.bf16.mxu0 0
        %247 = vmatpush1.bf16.msra.mxu0 0
        %248 = vmatprep.subr.bf16.mxu0 0
        %249 = vmatpush1.bf16.msra.mxu0 0
        %250 = vmatprep.subr.bf16.mxu0 0
        %251 = vmatpush1.bf16.msra.mxu0 0
        %252 = vmatprep.subr.bf16.mxu0 0
        %253 = vmatpush1.bf16.msra.mxu0 0
        %254 = vmatprep.subr.bf16.mxu0 0
        %255 = vmatpush1.bf16.msra.mxu0 0
        %256 = vmatprep.subr.bf16.mxu0 0
        %257 = vmatpush1.bf16.msra.mxu0 0
        %258 = vmatprep.subr.bf16.mxu0 0
        %259 = vmatpush1.bf16.msra.mxu0 0
        %260 = vmatprep.subr.bf16.mxu0 0
        %261 = vmatpush1.bf16.msra.mxu0 0
        %262 = vmatprep.subr.bf16.mxu0 0
        %263 = vmatpush1.bf16.msra.mxu0 0
        %264 = vmatprep.subr.bf16.mxu0 0
        %265 = vmatpush1.bf16.msra.mxu0 0
        %266 = vmatprep.subr.bf16.mxu0 0
        %267 = vmatpush1.bf16.msra.mxu0 0
        %268 = vmatprep.subr.bf16.mxu0 0
        %269 = vmatpush1.bf16.msra.mxu0 0
        %270 = vmatprep.subr.bf16.mxu0 0
        %271 = vmatpush1.bf16.msra.mxu0 0
        %272 = vmatprep.subr.bf16.mxu0 0
        %273 = vmatpush1.bf16.msra.mxu0 0
        %274 = vmatprep.mubr.bf16.mxu0 0
        %275 = vmatmul.mubr.bf16.gmra.mrb[0].mxu0 %v233
        %v276 = vpop.f32.mrb[0].mxu0
        %v277 = vadd.f32 0.0, %v276
        %v278 = vpop.f32.mrb[0].mxu0
        %v279 = vpop.f32.mrb[0].mxu0
        %v280 = vpop.f32.mrb[0].mxu0
        %281 = vdwg.mxu0
        %v282 = vadd.f32 %v214, %v277
        %vm283 = vcmask 523264
        %284 = vst.msk [vmem:[#allocation2] sm:$0xff] %vm283, %v282
        // Predicated region
        $region33: #{tpu_custom_call.1} parent=27 // pred_check
          %p285 = pneg %p208
        $region34: #{tpu_custom_call.1} parent=27 // pred_check_branch
          %287 = sbr.rel (%p285) target = $region36
        $region35: #{tpu_custom_call.1} parent=27 // pred_region
          %v288 = vld [vmem:[#allocation2] sm:$0xff]
          %289 = vst.msk [vmem:[%s189] sm:$0xff] %vm283, %v288
        $region36: #{tpu_custom_call.1} parent=27 // pred_fallthru
          _
        %s290 = sand.u32 %s101, 1
        %s291 = scalar_lea.sflag [#allocation4], %s290
        %s292 = sand.u32 %s101, 1
        %s293 = smul.addr %s292, 8
        %s294 = scalar_lea.vmem [#allocation3], %s293
        // Predicated region
        $region37: #{tpu_custom_call.1} parent=27 // pred_check
          %p295 = pneg %p111
        $region38: #{tpu_custom_call.1} parent=27 // pred_check_branch
          %297 = sbr.rel (%p295) target = $region40
        $region39: #{tpu_custom_call.1} parent=27 // pred_region
          %s299 = ssub.s32 128, 128
          %300 = vsyncadd %s291, %s299
          %s301 = sadd.s32 %s22, %s21
          %s302 = smul.addr %s301, 128
          %s303 = scalar_lea.hbm %s2, %s302
          %s305 = sshll.u32 %s294, 4
          %s306 = int_to_ptr.vmem [resolvable:$true] %s305
          %308 = dma.vmem_to_hbm [thread:$0]  %s306, 128, %s303, %s291
        $region40: #{tpu_custom_call.1} parent=27 // pred_fallthru
          _
      $region28: #{tpu_custom_call.1} parent=5 // pred_fallthru
        _
      %p309 = scmp.le.s32.totalorder 2, %s11
      // Predicated region
      $region41: #{tpu_custom_call.1} parent=5 // pred_check
        %p310 = pneg %p309
      $region42: #{tpu_custom_call.1} parent=5 // pred_check_branch
        %312 = sbr.rel (%p310) target = $region44
      $region43: #{tpu_custom_call.1} parent=5 // pred_region
        %s313 = ssub.s32 %s11, 2
        // Predicated region
        $region45: #{tpu_custom_call.1} parent=43 // pred_check
          %p314 = pneg %p117
        $region46: #{tpu_custom_call.1} parent=43 // pred_check_branch
          %316 = sbr.rel (%p314) target = $region48
        $region47: #{tpu_custom_call.1} parent=43 // pred_region
          %s317 = sand.u32 %s102, 1
          %s318 = scalar_lea.sflag [#allocation4], %s317
          %s319 = sand.u32 %s102, 1
          %s320 = smul.addr %s319, 8
          %s321 = scalar_lea.vmem [#allocation3], %s320
          %322 = dma.done %s318, 128
        $region48: #{tpu_custom_call.1} parent=43 // pred_fallthru
          _
      $region44: #{tpu_custom_call.1} parent=5 // pred_fallthru
        _
    $region6: #{tpu_custom_call.1} parent=1 // loop_footer
      %s15 = sadd.s32 1, %s11
    $region7: #{tpu_custom_call.1} parent=1 // loop_footer_branch
      %10 = sbr.rel target = $region3
    $region8: #{tpu_custom_call.1} parent=1 // loop_exit
      _
    %323 = vsyncpa [#allocation4], 1
    %s324 = scalar_lea.sflag [#allocation4], 1
    %325 = vsyncpa %s324, 1

</llo_original>
